<compile_context>
chip_gen: v5e
topology: v5e:2x2
jax: 0.10.0
libtpu: 0.0.40
codegen_flags: <defaults>
</compile_context>

<pallas_src>
import math

import jax
import jax.numpy as jnp
from jax import lax
from jax.experimental import pallas as pl
from jax.experimental.pallas import tpu as pltpu

BN_EPS = 1e-5


# ------------------------------ Pallas kernel -------------------------------

def _make_tconv_kernel(*, ks, s, NB, Vp, Cout, taps_q, taps_r, chunks):
    """Fused temporal-conv + BN(eval) kernel with a static tap/chunk schedule.

    Kernel refs:
      x_ref     : (NB*s, L*Vp, Cin)  bf16 -- residue streams, rows = (t, v)
      w_ref     : (ks, Cin, Cout)    bf16 -- per-tap weights, BN scale folded in
      shift_ref : (1, Cout)          f32  -- (conv_bias - mean) * scale + beta
      o_ref     : (NB, Mp, Cout)     bf16 -- Mp = T_out * Vp output rows
    """

    def kernel(x_ref, w_ref, shift_ref, o_ref):
        shift = shift_ref[...]                       # (1, Cout), hoisted
        for b in range(NB):                          # samples in this step
            for (t0, tt) in chunks:                  # M chunks (reg-resident acc)
                rows = tt * Vp
                acc = None
                for k in range(ks):                  # taps innermost: MXU
                    xk = x_ref[b * s + taps_r[k],    # back-to-back accumulation
                               pl.ds((t0 + taps_q[k]) * Vp, rows), :]
                    pk = jnp.dot(xk, w_ref[k],
                                 preferred_element_type=jnp.float32)
                    acc = pk if acc is None else acc + pk
                o_ref[b, pl.ds(t0 * Vp, rows), :] = (
                    acc + shift).astype(o_ref.dtype)

    return kernel


def _pick_nb(N, per_sample_bytes, target_bytes=2 * 1024 * 1024):
    """Samples per grid step: ~target_bytes of input, divides N, grid >= 2."""
    nb = max(1, target_bytes // max(1, per_sample_bytes))
    if N >= 2:
        nb = min(nb, N // 2)          # keep >= 2 steps so both v7x TCs get work
    nb = max(1, min(nb, N))
    while N % nb:
        nb -= 1
    return nb


# ------------------------------ forward wrapper ------------------------------

def temporal_conv_forward(x, params, *, kernel_size, stride=1, dilation=1,
                          compute_dtype=jnp.bfloat16):
    """TemporalConv.forward.  x: (N, Cin, T, V) float32 (PyTorch NCHW)."""
    N, Cin, T, V = x.shape
    w = params['w']                                   # (ks, Cin, Cout)
    ks, s, d = kernel_size, stride, dilation
    assert w.shape[0] == ks and w.shape[1] == Cin
    Cout = w.shape[2]

    pad = (ks + (ks - 1) * (d - 1) - 1) // 2          # == ((ks - 1) * d) // 2
    T_pad = T + 2 * pad
    T_out = (T_pad - d * (ks - 1) - 1) // s + 1
    Vp = -(-V // 8) * 8                               # sublane-align V
    Mp = T_out * Vp

    # ---- fold conv bias + eval-mode BN into (weights*scale, shift), in f32
    # BEFORE the bf16 cast (avoids extra quantization error).
    inv = (params['bn_g'] / jnp.sqrt(params['bn_rv'] + BN_EPS)).astype(jnp.float32)
    w_folded = (w.astype(jnp.float32) * inv[None, None, :]).astype(compute_dtype)
    shift = ((params['b'] - params['bn_rm']) * inv + params['bn_b'])
    shift = shift.reshape(1, Cout).astype(jnp.float32)

    # ---- layout plumbing (once): NCHW -> channel-last, pad time and V,
    # split the padded sequence into `stride` residue streams, flatten (t, v)
    # into rows so every tap is a contiguous, 8-row-aligned window.
    xt = jnp.transpose(x, (0, 2, 3, 1))                           # (N,T,V,Cin)
    xt = jnp.pad(xt, ((0, 0), (pad, pad), (0, Vp - V), (0, 0)))   # (N,T_pad,Vp,Cin)

    taps_q = [(k * d) // s for k in range(ks)]        # frame offset within stream
    taps_r = [(k * d) % s for k in range(ks)]         # residue stream index
    L = T_out + max(taps_q)                           # frames per stream

    if s == 1:
        # single stream; L == T_pad, so this is a pure reshape (no extra copy)
        xs = xt[:, :L].reshape(N, L * Vp, Cin)
    else:
        streams = []
        for r in range(s):
            st = xt[:, r::s][:, :L]                   # (N, <=L, Vp, Cin)
            if st.shape[1] < L:
                st = jnp.pad(st, ((0, 0), (0, L - st.shape[1]), (0, 0), (0, 0)))
            streams.append(st)
        xs = jnp.stack(streams, axis=1).reshape(N * s, L * Vp, Cin)
    xs = xs.astype(compute_dtype)

    # ---- tiling choices
    itemsize = jnp.dtype(compute_dtype).itemsize
    per_sample_bytes = s * L * Vp * Cin * itemsize
    NB = _pick_nb(N, per_sample_bytes)
    grid = (N // NB,)

    # M chunk (in output frames): keep the f32 accumulator <= ~64 KiB so it
    # stays in vregs across the whole tap loop (no spills, esp. on v5e).
    TT = max(1, min(T_out, (64 * 1024) // (4 * Cout * Vp)))
    chunks = []
    t0 = 0
    while t0 < T_out:
        tt = min(TT, T_out - t0)
        chunks.append((t0, tt))
        t0 += tt

    kernel = _make_tconv_kernel(ks=ks, s=s, NB=NB, Vp=Vp, Cout=Cout,
                                taps_q=taps_q, taps_r=taps_r, chunks=chunks)

    out = pl.pallas_call(
        kernel,
        out_shape=jax.ShapeDtypeStruct((N, Mp, Cout), compute_dtype),
        grid=grid,
        in_specs=[
            # NB samples' residue streams per step: rows [g*NB*s, (g+1)*NB*s)
            pl.BlockSpec((NB * s, L * Vp, Cin), lambda g: (g, 0, 0)),
            # weights / shift stay resident across the grid
            pl.BlockSpec((ks, Cin, Cout), lambda g: (0, 0, 0)),
            pl.BlockSpec((1, Cout), lambda g: (0, 0)),
        ],
        out_specs=pl.BlockSpec((NB, Mp, Cout), lambda g: (g, 0, 0)),
        compiler_params=pltpu.CompilerParams(
            dimension_semantics=("parallel",),       # megacore on v7x
            vmem_limit_bytes=48 * 1024 * 1024),      # safe on v5e/v6e/v7x
    )(xs, w_folded, shift)

    # one exit pass: drop padded V rows, back to PyTorch NCHW, f32
    y = out.reshape(N, T_out, Vp, Cout)[:, :, :V, :]
    return jnp.transpose(y, (0, 3, 1, 2)).astype(jnp.float32)


# --------------------------- pure-JAX reference ------------------------------

def temporal_conv_reference(x, params, *, kernel_size, stride=1, dilation=1,
                            compute_dtype=jnp.bfloat16):
    """XLA reference (inputs quantized to the kernel's compute dtype)."""
    ks, s, d = kernel_size, stride, dilation
    pad = (ks + (ks - 1) * (d - 1) - 1) // 2
    xq = x.astype(compute_dtype).astype(jnp.float32)
    wq = params['w'].astype(compute_dtype).astype(jnp.float32)   # (ks,Cin,Cout)
    w_oihw = jnp.transpose(wq, (2, 1, 0))[:, :, :, None]         # (Cout,Cin,ks,1)
    y = lax.conv_general_dilated(
        xq, w_oihw, window_strides=(s, 1), padding=((pad, pad), (0, 0)),
        rhs_dilation=(d, 1), dimension_numbers=('NCHW', 'OIHW', 'NCHW'))
    y = y + params['b'][None, :, None, None]
    inv = params['bn_g'] / jnp.sqrt(params['bn_rv'] + BN_EPS)
    return ((y - params['bn_rm'][None, :, None, None])
            * inv[None, :, None, None]
            + params['bn_b'][None, :, None, None])


# ------------------------------- parameters ----------------------------------

def init_temporal_conv_params(key, in_channels, out_channels, kernel_size):
    kw, kb = jax.random.split(key)
    std = math.sqrt(2.0 / (in_channels * kernel_size))
    return {
        'w': jax.random.normal(kw, (kernel_size, in_channels, out_channels),
                               jnp.float32) * std,
        'b': jax.random.uniform(kb, (out_channels,), jnp.float32, -0.1, 0.1),
        'bn_g': jnp.ones((out_channels,), jnp.float32),
        'bn_b': jnp.zeros((out_channels,), jnp.float32),
        'bn_rm': jnp.zeros((out_channels,), jnp.float32),   # running_mean
        'bn_rv': jnp.ones((out_channels,), jnp.float32),    # running_var
    }


# ---------------------------------- main --------------------------------------

if __name__ == "__main__":
    # small shapes consistent with CTR-GCN usage: (N*M, C_branch, T, V)
    N, Cin, T, V = 2, 16, 16, 5
    Cout, ks = 32, 5

    key = jax.random.PRNGKey(0)
    kx, kp = jax.random.split(key)
    x = jax.random.normal(kx, (N, Cin, T, V), jnp.float32)
    params = init_temporal_conv_params(kp, Cin, Cout, ks)

    fwd = jax.jit(temporal_conv_forward,
                  static_argnames=('kernel_size', 'stride', 'dilation',
                                   'compute_dtype'))

    ok = True
    for (stride, dilation) in [(1, 1), (1, 2), (2, 1)]:
        y = fwd(x, params, kernel_size=ks, stride=stride, dilation=dilation)
        y = jax.block_until_ready(y)
        y_ref = temporal_conv_reference(x, params, kernel_size=ks,
                                        stride=stride, dilation=dilation)
        y_ref = jax.block_until_ready(y_ref)
        assert y.shape == y_ref.shape, (y.shape, y_ref.shape)
        if not jnp.allclose(y, y_ref, rtol=1e-2, atol=1e-2):
            ok = False
            print("MISMATCH", stride, dilation,
                  float(jnp.max(jnp.abs(y - y_ref))))

    if ok:
        print("KERNEL_OK")
</pallas_src>

<mosaic_0001>
module attributes {stable_mosaic.version = 11 : i64} {
  func.func @kernel(%arg0: i32, %arg1: memref<1x160x16xbf16, #tpu.memory_space<vmem>>, %arg2: memref<5x16x32xbf16, #tpu.memory_space<vmem>>, %arg3: memref<1x32xf32, #tpu.memory_space<vmem>>, %arg4: memref<1x128x32xbf16, #tpu.memory_space<vmem>>) attributes {dimension_semantics = [#tpu.dimension_semantics<parallel>], iteration_bounds = array<i64: 2>, scalar_prefetch = 0 : i64, scratch_operands = 0 : i64, tpu.core_type = #tpu.core_type<tc>, window_params = [{transform_indices = @transform_0, window_bounds = array<i64: 1, 160, 16>}, {pipeline_mode = #tpu.pipeline_mode<synchronous>, transform_indices = @transform_1, window_bounds = array<i64: 5, 16, 32>}, {pipeline_mode = #tpu.pipeline_mode<synchronous>, transform_indices = @transform_2, window_bounds = array<i64: 1, 32>}, {transform_indices = @transform_3, window_bounds = array<i64: 1, 128, 32>}]} {
    %c0 = arith.constant 0 : index
    %c0_0 = arith.constant 0 : index
    %0 = vector.load %arg3[%c0, %c0_0] : memref<1x32xf32, #tpu.memory_space<vmem>>, vector<1x32xf32>
    %c0_1 = arith.constant 0 : index
    %c0_2 = arith.constant 0 : index
    %c0_3 = arith.constant 0 : index
    %1 = vector.load %arg1[%c0_1, %c0_2, %c0_3] : memref<1x160x16xbf16, #tpu.memory_space<vmem>>, vector<1x128x16xbf16>
    %2 = vector.shape_cast %1 : vector<1x128x16xbf16> to vector<128x16xbf16>
    %c0_4 = arith.constant 0 : index
    %c0_5 = arith.constant 0 : index
    %c0_6 = arith.constant 0 : index
    %3 = vector.load %arg2[%c0_4, %c0_5, %c0_6] : memref<5x16x32xbf16, #tpu.memory_space<vmem>>, vector<1x16x32xbf16>
    %4 = vector.shape_cast %3 : vector<1x16x32xbf16> to vector<16x32xbf16>
    %cst = arith.constant dense<0.000000e+00> : vector<128x32xf32>
    %5 = tpu.matmul %2, %4, %cst {dimension_numbers = #tpu.dot_dimension_numbers<[1], [0], [0], [1], [0, 0, 1, 1], [], []>} : vector<128x16xbf16>, vector<16x32xbf16>, vector<128x32xf32> -> vector<128x32xf32>
    %c0_7 = arith.constant 0 : index
    %c8 = arith.constant 8 : index
    %c0_8 = arith.constant 0 : index
    %6 = vector.load %arg1[%c0_7, %c8, %c0_8] : memref<1x160x16xbf16, #tpu.memory_space<vmem>>, vector<1x128x16xbf16>
    %7 = vector.shape_cast %6 : vector<1x128x16xbf16> to vector<128x16xbf16>
    %c1 = arith.constant 1 : index
    %c0_9 = arith.constant 0 : index
    %c0_10 = arith.constant 0 : index
    %8 = vector.load %arg2[%c1, %c0_9, %c0_10] : memref<5x16x32xbf16, #tpu.memory_space<vmem>>, vector<1x16x32xbf16>
    %9 = vector.shape_cast %8 : vector<1x16x32xbf16> to vector<16x32xbf16>
    %cst_11 = arith.constant dense<0.000000e+00> : vector<128x32xf32>
    %10 = tpu.matmul %7, %9, %cst_11 {dimension_numbers = #tpu.dot_dimension_numbers<[1], [0], [0], [1], [0, 0, 1, 1], [], []>} : vector<128x16xbf16>, vector<16x32xbf16>, vector<128x32xf32> -> vector<128x32xf32>
    %11 = arith.addf %5, %10 : vector<128x32xf32>
    %c0_12 = arith.constant 0 : index
    %c16 = arith.constant 16 : index
    %c0_13 = arith.constant 0 : index
    %12 = vector.load %arg1[%c0_12, %c16, %c0_13] : memref<1x160x16xbf16, #tpu.memory_space<vmem>>, vector<1x128x16xbf16>
    %13 = vector.shape_cast %12 : vector<1x128x16xbf16> to vector<128x16xbf16>
    %c2 = arith.constant 2 : index
    %c0_14 = arith.constant 0 : index
    %c0_15 = arith.constant 0 : index
    %14 = vector.load %arg2[%c2, %c0_14, %c0_15] : memref<5x16x32xbf16, #tpu.memory_space<vmem>>, vector<1x16x32xbf16>
    %15 = vector.shape_cast %14 : vector<1x16x32xbf16> to vector<16x32xbf16>
    %cst_16 = arith.constant dense<0.000000e+00> : vector<128x32xf32>
    %16 = tpu.matmul %13, %15, %cst_16 {dimension_numbers = #tpu.dot_dimension_numbers<[1], [0], [0], [1], [0, 0, 1, 1], [], []>} : vector<128x16xbf16>, vector<16x32xbf16>, vector<128x32xf32> -> vector<128x32xf32>
    %17 = arith.addf %11, %16 : vector<128x32xf32>
    %c0_17 = arith.constant 0 : index
    %c24 = arith.constant 24 : index
    %c0_18 = arith.constant 0 : index
    %18 = vector.load %arg1[%c0_17, %c24, %c0_18] : memref<1x160x16xbf16, #tpu.memory_space<vmem>>, vector<1x128x16xbf16>
    %19 = vector.shape_cast %18 : vector<1x128x16xbf16> to vector<128x16xbf16>
    %c3 = arith.constant 3 : index
    %c0_19 = arith.constant 0 : index
    %c0_20 = arith.constant 0 : index
    %20 = vector.load %arg2[%c3, %c0_19, %c0_20] : memref<5x16x32xbf16, #tpu.memory_space<vmem>>, vector<1x16x32xbf16>
    %21 = vector.shape_cast %20 : vector<1x16x32xbf16> to vector<16x32xbf16>
    %cst_21 = arith.constant dense<0.000000e+00> : vector<128x32xf32>
    %22 = tpu.matmul %19, %21, %cst_21 {dimension_numbers = #tpu.dot_dimension_numbers<[1], [0], [0], [1], [0, 0, 1, 1], [], []>} : vector<128x16xbf16>, vector<16x32xbf16>, vector<128x32xf32> -> vector<128x32xf32>
    %23 = arith.addf %17, %22 : vector<128x32xf32>
    %c0_22 = arith.constant 0 : index
    %c32 = arith.constant 32 : index
    %c0_23 = arith.constant 0 : index
    %24 = vector.load %arg1[%c0_22, %c32, %c0_23] : memref<1x160x16xbf16, #tpu.memory_space<vmem>>, vector<1x128x16xbf16>
    %25 = vector.shape_cast %24 : vector<1x128x16xbf16> to vector<128x16xbf16>
    %c4 = arith.constant 4 : index
    %c0_24 = arith.constant 0 : index
    %c0_25 = arith.constant 0 : index
    %26 = vector.load %arg2[%c4, %c0_24, %c0_25] : memref<5x16x32xbf16, #tpu.memory_space<vmem>>, vector<1x16x32xbf16>
    %27 = vector.shape_cast %26 : vector<1x16x32xbf16> to vector<16x32xbf16>
    %cst_26 = arith.constant dense<0.000000e+00> : vector<128x32xf32>
    %28 = tpu.matmul %25, %27, %cst_26 {dimension_numbers = #tpu.dot_dimension_numbers<[1], [0], [0], [1], [0, 0, 1, 1], [], []>} : vector<128x16xbf16>, vector<16x32xbf16>, vector<128x32xf32> -> vector<128x32xf32>
    %29 = arith.addf %23, %28 : vector<128x32xf32>
    %30 = vector.broadcast %0 : vector<1x32xf32> to vector<128x32xf32>
    %31 = arith.addf %29, %30 : vector<128x32xf32>
    %32 = arith.truncf %31 : vector<128x32xf32> to vector<128x32xbf16>
    %c0_27 = arith.constant 0 : index
    %c0_28 = arith.constant 0 : index
    %c0_29 = arith.constant 0 : index
    %33 = vector.load %arg4[%c0_27, %c0_28, %c0_29] : memref<1x128x32xbf16, #tpu.memory_space<vmem>>, vector<1x128x32xbf16>
    %34 = vector.shape_cast %33 : vector<1x128x32xbf16> to vector<128x32xbf16>
    %35 = vector.shape_cast %32 : vector<128x32xbf16> to vector<1x128x32xbf16>
    tpu.vector_store %arg4[%c0_27, %c0_28, %c0_29], %35 {strides = array<i32>} : memref<1x128x32xbf16, #tpu.memory_space<vmem>>, vector<1x128x32xbf16>,
    return
  }
  func.func @transform_0(%arg0: i32) -> (i32, i32, i32) {
    %c0_i32 = arith.constant 0 : i32
    %c0_i32_0 = arith.constant 0 : i32
    %c0_i32_1 = arith.constant 0 : i32
    return %arg0, %c0_i32, %c0_i32_0 : i32, i32, i32
  }
  func.func @transform_1(%arg0: i32) -> (i32, i32, i32) {
    %c0_i32 = arith.constant 0 : i32
    %c0_i32_0 = arith.constant 0 : i32
    %c0_i32_1 = arith.constant 0 : i32
    %c0_i32_2 = arith.constant 0 : i32
    return %c0_i32, %c0_i32_0, %c0_i32_1 : i32, i32, i32
  }
  func.func @transform_2(%arg0: i32) -> (i32, i32) {
    %c0_i32 = arith.constant 0 : i32
    %c0_i32_0 = arith.constant 0 : i32
    %c0_i32_1 = arith.constant 0 : i32
    return %c0_i32, %c0_i32_0 : i32, i32
  }
  func.func @transform_3(%arg0: i32) -> (i32, i32, i32) {
    %c0_i32 = arith.constant 0 : i32
    %c0_i32_0 = arith.constant 0 : i32
    %c0_i32_1 = arith.constant 0 : i32
    return %arg0, %c0_i32, %c0_i32_0 : i32, i32, i32
  }
}

</mosaic_0001>

<llo_original>
// kernel: temporal_conv_forward.1
$region0: #{temporal_conv_forward.1}
  #allocation0 [shape = 'u32[]', space=smem, size = 0x4, offset = 0x4, fixed_abs, tag = 'smem constant byte address 0x4 - core index']
  #allocation1 [shape = 'u32[72,128]{1,0:T(1,128)}', space=vmem, size = 0x9000, scoped, tag = 'internal scratch']
  %s0 = inlined_call_operand.vmem [shape: bf16[2,160,16], index: 0, kind: input, shape index: {}]
  %s1 = inlined_call_operand.vmem [shape: bf16[5,16,32], index: 1, kind: input, shape index: {}]
  %s2 = inlined_call_operand.vmem [shape: f32[1,32], index: 2, kind: input, shape index: {}]
  %s3 = inlined_call_operand.vmem [shape: bf16[2,128,32], index: 3, kind: output, shape index: {}]
  %s4 = sld [smem:[#allocation0]]
  $region45: #{temporal_conv_forward.1} parent=0
    _
  %s6 = ssub.s32 1, %s4
  %s7 = scalar_select 0, %s6, %s4
  loop: start=0, step=1, limit=4
  $region2: #{temporal_conv_forward.1} parent=0 // loop_pre_header
    _
  $region3: #{temporal_conv_forward.1} parent=0 // loop_header
    %s9 = sphi 0, %s13
    %p10 = scmp.ge.s32.totalorder %s9, 4
    %s19 = sphi 0, %s21
    %s22 = sphi 0, %s19
    %s23 = sphi 0, %s22
    %s39 = sphi 0, %s23
    %s43 = sphi 0, %s43
    %s45 = sphi 0, %s43
    %s46 = sphi 0, %s45
    %s60 = sphi 0, %s46
    %s64 = sphi 0, %s64
    %s66 = sphi 0, %s64
    %s67 = sphi 0, %s66
    %s81 = sphi 0, %s67
    %s87 = sphi 0, %s89
    %s90 = sphi 0, %s87
    %s91 = sphi 0, %s90
    %s107 = sphi 0, %s91
  $region4: #{temporal_conv_forward.1} parent=0 // loop_header_branch
    %12 = sbr.rel (%p10) target = $region8
  $region5: #{temporal_conv_forward.1} parent=0 // loop_body
    %s14 = ssub.s32 %s9, 1
    %s15 = ssub.s32 %s9, 2
    %s16 = sadd.s32 %s9, 1
    %s17 = ssub.s32 %s9, %s16
    %p18 = scmp.eq.s32.totalorder %s17, 0
    %s20 = sadd.s32 %s19, 1
    %s21 = scalar_select %p18, %s19, %s20
    %p24 = pneg %p18
    %p25 = scmp.eq.s32.totalorder %s9, 1
    %p26 = por %p24, %p25
    %p27 = scmp.ne.s32.totalorder %s19, %s22
    %p28 = scmp.eq.s32.totalorder %s9, 0
    %p29 = por %p27, %p28
    %p30 = scmp.ne.s32.totalorder %s19, %s22
    %p31 = scmp.eq.s32.totalorder %s14, 1
    %p32 = por %p30, %p31
    %p33 = scmp.ne.s32.totalorder %s22, %s23
    %p34 = scmp.eq.s32.totalorder %s14, 0
    %p35 = por %p33, %p34
    %p36 = scmp.ne.s32.totalorder %s22, %s23
    %p37 = scmp.eq.s32.totalorder %s15, 1
    %p38 = por %p36, %p37
    %p40 = scmp.ne.s32.totalorder %s23, %s39
    %p41 = scmp.eq.s32.totalorder %s15, 0
    %p42 = por %p40, %p41
    %s44 = sadd.s32 %s43, 1
    %p47 = scmp.eq.s32.totalorder %s9, 1
    %p48 = scmp.ne.s32.totalorder %s43, %s45
    %p49 = scmp.eq.s32.totalorder %s9, 0
    %p50 = por %p48, %p49
    %p51 = scmp.ne.s32.totalorder %s43, %s45
    %p52 = scmp.eq.s32.totalorder %s14, 1
    %p53 = por %p51, %p52
    %p54 = scmp.ne.s32.totalorder %s45, %s46
    %p55 = scmp.eq.s32.totalorder %s14, 0
    %p56 = por %p54, %p55
    %p57 = scmp.ne.s32.totalorder %s45, %s46
    %p58 = scmp.eq.s32.totalorder %s15, 1
    %p59 = por %p57, %p58
    %p61 = scmp.ne.s32.totalorder %s46, %s60
    %p62 = scmp.eq.s32.totalorder %s15, 0
    %p63 = por %p61, %p62
    %s65 = sadd.s32 %s64, 1
    %p68 = scmp.eq.s32.totalorder %s9, 1
    %p69 = scmp.ne.s32.totalorder %s64, %s66
    %p70 = scmp.eq.s32.totalorder %s9, 0
    %p71 = por %p69, %p70
    %p72 = scmp.ne.s32.totalorder %s64, %s66
    %p73 = scmp.eq.s32.totalorder %s14, 1
    %p74 = por %p72, %p73
    %p75 = scmp.ne.s32.totalorder %s66, %s67
    %p76 = scmp.eq.s32.totalorder %s14, 0
    %p77 = por %p75, %p76
    %p78 = scmp.ne.s32.totalorder %s66, %s67
    %p79 = scmp.eq.s32.totalorder %s15, 1
    %p80 = por %p78, %p79
    %p82 = scmp.ne.s32.totalorder %s67, %s81
    %p83 = scmp.eq.s32.totalorder %s15, 0
    %p84 = por %p82, %p83
    %s85 = ssub.s32 %s9, %s16
    %p86 = scmp.eq.s32.totalorder %s85, 0
    %s88 = sadd.s32 %s87, 1
    %s89 = scalar_select %p86, %s87, %s88
    %p92 = pneg %p86
    %p93 = scmp.eq.s32.totalorder %s9, 1
    %p94 = por %p92, %p93
    %p95 = scmp.ne.s32.totalorder %s87, %s90
    %p96 = scmp.eq.s32.totalorder %s9, 0
    %p97 = por %p95, %p96
    %p98 = scmp.ne.s32.totalorder %s87, %s90
    %p99 = scmp.eq.s32.totalorder %s14, 1
    %p100 = por %p98, %p99
    %p101 = scmp.ne.s32.totalorder %s90, %s91
    %p102 = scmp.eq.s32.totalorder %s14, 0
    %p103 = por %p101, %p102
    %p104 = scmp.ne.s32.totalorder %s90, %s91
    %p105 = scmp.eq.s32.totalorder %s15, 1
    %p106 = por %p104, %p105
    %p108 = scmp.ne.s32.totalorder %s91, %s107
    %p109 = scmp.eq.s32.totalorder %s15, 0
    %p110 = por %p108, %p109
    %p111 = scmp.le.s32.totalorder 1, %s9
    %p112 = scmp.lt.s32.totalorder %s9, 3
    %p113 = pnand %p111, %p112
    %p114 = pneg %p113
    // Predicated region
    $region9: #{temporal_conv_forward.1} parent=5 // pred_check
      _
    $region10: #{temporal_conv_forward.1} parent=5 // pred_check_branch
      %116 = sbr.rel (%p113) target = $region12
    $region11: #{temporal_conv_forward.1} parent=5 // pred_region
      %s117 = ssub.s32 %s9, 1
      // Predicated region
      $region13: #{temporal_conv_forward.1} parent=11 // pred_check
        %p118 = pneg %p56
      $region14: #{temporal_conv_forward.1} parent=11 // pred_check_branch
        %120 = sbr.rel (%p118) target = $region16
      $region15: #{temporal_conv_forward.1} parent=11 // pred_region
        _
      $region16: #{temporal_conv_forward.1} parent=11 // pred_fallthru
        _
      // Predicated region
      $region17: #{temporal_conv_forward.1} parent=11 // pred_check
        %p121 = pneg %p77
      $region18: #{temporal_conv_forward.1} parent=11 // pred_check_branch
        %123 = sbr.rel (%p121) target = $region20
      $region19: #{temporal_conv_forward.1} parent=11 // pred_region
        _
      $region20: #{temporal_conv_forward.1} parent=11 // pred_fallthru
        _
    $region12: #{temporal_conv_forward.1} parent=5 // pred_fallthru
      _
    %p124 = scmp.lt.s32.totalorder %s9, 2
    // Predicated region
    $region21: #{temporal_conv_forward.1} parent=5 // pred_check
      %p125 = pneg %p124
    $region22: #{temporal_conv_forward.1} parent=5 // pred_check_branch
      %127 = sbr.rel (%p125) target = $region24
    $region23: #{temporal_conv_forward.1} parent=5 // pred_region
      // Predicated region
      $region25: #{temporal_conv_forward.1} parent=23 // pred_check
        %p128 = pneg %p29
      $region26: #{temporal_conv_forward.1} parent=23 // pred_check_branch
        %130 = sbr.rel (%p128) target = $region28
      $region27: #{temporal_conv_forward.1} parent=23 // pred_region
        %p131 = scmp.lt.s32.totalorder %s9, 1
        %s132 = scalar_select %p131, %s9, 1
        %s133 = smul.addr %s132, 20
        %s134 = smul.addr %s133, 4
        %s135 = scalar_lea.vmem %s0, %s134
      $region28: #{temporal_conv_forward.1} parent=23 // pred_fallthru
        _
    $region24: #{temporal_conv_forward.1} parent=5 // pred_fallthru
      _
    %p136 = scmp.le.s32.totalorder 1, %s9
    %p137 = scmp.lt.s32.totalorder %s9, 3
    %p138 = pnand %p136, %p137
    %p139 = pneg %p138
    // Predicated region
    $region29: #{temporal_conv_forward.1} parent=5 // pred_check
      _
    $region30: #{temporal_conv_forward.1} parent=5 // pred_check_branch
      %141 = sbr.rel (%p138) target = $region32
    $region31: #{temporal_conv_forward.1} parent=5 // pred_region
      %s142 = ssub.s32 %s9, 1
      %p143 = scmp.lt.s32.totalorder %s14, 1
      %s144 = scalar_select %p143, %s14, 1
      %s145 = smul.addr %s144, 20
      %s146 = smul.addr %s145, 4
      %s147 = scalar_lea.vmem %s0, %s146
      %p148 = pneg %p35
      %p149 = pneg %p32
      %p150 = pneg %p56
      %p151 = pneg %p53
      %p152 = pneg %p77
      %p153 = pneg %p74
      %p154 = pneg %p103
      %p155 = pneg %p100
      %p156 = scmp.lt.s32.totalorder %s14, 1
      %s157 = scalar_select %p156, %s14, 1
      %s158 = smul.addr %s157, 16
      %s159 = smul.addr %s158, 4
      %s160 = scalar_lea.vmem %s3, %s159
      %p161 = scmp.lt.s32.totalorder %s14, 1
      %s162 = scalar_select %p161, %s14, 1
      %s163 = smul.addr %s162, 20
      %s164 = smul.addr %s163, 4
      %s165 = scalar_lea.vmem %s0, %s164
      %p166 = scmp.lt.s32.totalorder %s14, 1
      %s167 = scalar_select %p166, %s14, 1
      %s168 = smul.addr %s167, 16
      %s169 = smul.addr %s168, 4
      %s170 = scalar_lea.vmem %s3, %s169
      %v172 = vld [vmem:[%s2] sm:$0x1]
      %v173 = vld [vmem:[%s165] sm:$0xf]
      %v174 = vld [vmem:[%s165 + $0x4] sm:$0xf]
      %v175 = vld [vmem:[%s165 + $0x8] sm:$0xf]
      %v176 = vld [vmem:[%s165 + $0xc] sm:$0xf]
      %v177 = vld [vmem:[%s165 + $0x10] sm:$0xf]
      %v178 = vld [vmem:[%s165 + $0x14] sm:$0xf]
      %v179 = vld [vmem:[%s165 + $0x18] sm:$0xf]
      %v180 = vld [vmem:[%s165 + $0x1c] sm:$0xf]
      %v181 = vld [vmem:[%s165 + $0x20] sm:$0xf]
      %v182 = vld [vmem:[%s165 + $0x24] sm:$0xf]
      %v183 = vld [vmem:[%s165 + $0x28] sm:$0xf]
      %v184 = vld [vmem:[%s165 + $0x2c] sm:$0xf]
      %v185 = vld [vmem:[%s165 + $0x30] sm:$0xf]
      %v186 = vld [vmem:[%s165 + $0x34] sm:$0xf]
      %v187 = vld [vmem:[%s165 + $0x38] sm:$0xf]
      %v188 = vld [vmem:[%s165 + $0x3c] sm:$0xf]
      %v189 = vld [vmem:[%s1] sm:$0xf]
      %v190 = vld [vmem:[%s1 + $0x4] sm:$0xf]
      %v191 = vld [vmem:[%s165 + $0x40] sm:$0xf]
      %s192 = scalar_lea.vmem %s1, 8
      %v193 = vld [vmem:[%s192] sm:$0xf]
      %v194 = vld [vmem:[%s192 + $0x4] sm:$0xf]
      %v211 = vunpack.c.l.b16 %v174
      %v212 = vunpack.c.l.b16 %v175
      %v213 = vunpack.c.l.b16 %v176
      %v214 = vunpack.c.l.b16 %v177
      %v215 = vunpack.c.l.b16 %v178
      %v216 = vunpack.c.l.b16 %v179
      %v217 = vunpack.c.l.b16 %v180
      %v218 = vunpack.c.l.b16 %v181
      %v219 = vunpack.c.l.b16 %v182
      %v220 = vunpack.c.l.b16 %v183
      %v221 = vunpack.c.l.b16 %v184
      %v222 = vunpack.c.l.b16 %v185
      %v223 = vunpack.c.l.b16 %v186
      %v224 = vunpack.c.l.b16 %v187
      %v225 = vunpack.c.l.b16 %v188
      %v226 = vunpack.c.l.b16 %v191
      %v227 = vpack.c.b16 %v212, %v211
      %v228 = vpack.c.b16 %v214, %v213
      %v229 = vpack.c.b16 %v216, %v215
      %v230 = vpack.c.b16 %v218, %v217
      %v231 = vpack.c.b16 %v220, %v219
      %v232 = vpack.c.b16 %v222, %v221
      %v233 = vpack.c.b16 %v224, %v223
      %v234 = vpack.c.b16 %v226, %v225
      %v237 = vunpack.c.l.b16 %v193
      %v238 = vunpack.c.l.b16 %v194
      %v239 = vpack.c.b16 %v238, %v237
      %vm241 = vcmask 130048
      %v243 = vsel %vm241, %v227, 0
      %v246 = vsel %vm241, %v228, 0
      %v249 = vsel %vm241, %v229, 0
      %v252 = vsel %vm241, %v230, 0
      %v255 = vsel %vm241, %v231, 0
      %v258 = vsel %vm241, %v232, 0
      %v261 = vsel %vm241, %v233, 0
      %v264 = vsel %vm241, %v234, 0
      %266 = vmatpush.bf16.msra.mxu0 0
      %267 = vmatpush.bf16.msra.mxu0 0
      %268 = vmatpush.bf16.msra.mxu0 0
      %269 = vmatpush.bf16.msra.mxu0 0
      %270 = vmatpush.bf16.msra.mxu0 0
      %271 = vmatpush.bf16.msra.mxu0 0
      %272 = vmatpush.bf16.msra.mxu0 0
      %273 = vmatpush.bf16.msra.mxu0 %v239
      %274 = vmatmul.bf16.gmra.mxu0 %v243
      %v275 = vpop.f32.mrf.mxu0
      %v276 = vadd.f32 0.0, %v275
      %v277 = vpop.f32.mrf.mxu0
      %v278 = vadd.f32 0.0, %v277
      %279 = vmatmul.bf16.gmra.mxu0 %v246
      %v280 = vpop.f32.mrf.mxu0
      %v281 = vadd.f32 0.0, %v280
      %v282 = vpop.f32.mrf.mxu0
      %v283 = vadd.f32 0.0, %v282
      %284 = vmatmul.bf16.gmra.mxu0 %v249
      %v285 = vpop.f32.mrf.mxu0
      %v286 = vadd.f32 0.0, %v285
      %v287 = vpop.f32.mrf.mxu0
      %v288 = vadd.f32 0.0, %v287
      %289 = vmatmul.bf16.gmra.mxu0 %v252
      %v290 = vpop.f32.mrf.mxu0
      %v291 = vadd.f32 0.0, %v290
      %v292 = vpop.f32.mrf.mxu0
      %v293 = vadd.f32 0.0, %v292
      %294 = vmatmul.bf16.gmra.mxu0 %v255
      %v295 = vpop.f32.mrf.mxu0
      %v296 = vadd.f32 0.0, %v295
      %v297 = vpop.f32.mrf.mxu0
      %v298 = vadd.f32 0.0, %v297
      %299 = vmatmul.bf16.gmra.mxu0 %v258
      %v300 = vpop.f32.mrf.mxu0
      %v301 = vadd.f32 0.0, %v300
      %v302 = vpop.f32.mrf.mxu0
      %v303 = vadd.f32 0.0, %v302
      %304 = vmatmul.bf16.gmra.mxu0 %v261
      %v305 = vpop.f32.mrf.mxu0
      %v306 = vadd.f32 0.0, %v305
      %v307 = vpop.f32.mrf.mxu0
      %v308 = vadd.f32 0.0, %v307
      %309 = vmatmul.bf16.gmra.mxu0 %v264
      %v310 = vpop.f32.mrf.mxu0
      %v311 = vadd.f32 0.0, %v310
      %v312 = vpop.f32.mrf.mxu0
      %v313 = vadd.f32 0.0, %v312
      %314 = vdwg.mxu0
      %v316 = vunpack.c.l.b16 %v173
      %v317 = vpack.c.b16 %v211, %v316
      %v318 = vpack.c.b16 %v213, %v212
      %v319 = vpack.c.b16 %v215, %v214
      %v320 = vpack.c.b16 %v217, %v216
      %v321 = vpack.c.b16 %v219, %v218
      %v322 = vpack.c.b16 %v221, %v220
      %v323 = vpack.c.b16 %v223, %v222
      %v324 = vpack.c.b16 %v225, %v224
      %v327 = vunpack.c.l.b16 %v189
      %v328 = vunpack.c.l.b16 %v190
      %v329 = vpack.c.b16 %v328, %v327
      %v332 = vsel %vm241, %v317, 0
      %v335 = vsel %vm241, %v318, 0
      %v338 = vsel %vm241, %v319, 0
      %v341 = vsel %vm241, %v320, 0
      %v344 = vsel %vm241, %v321, 0
      %v347 = vsel %vm241, %v322, 0
      %v350 = vsel %vm241, %v323, 0
      %v353 = vsel %vm241, %v324, 0
      %355 = vmatpush.bf16.msra.mxu0 0
      %356 = vmatpush.bf16.msra.mxu0 0
      %357 = vmatpush.bf16.msra.mxu0 0
      %358 = vmatpush.bf16.msra.mxu0 0
      %359 = vmatpush.bf16.msra.mxu0 0
      %360 = vmatpush.bf16.msra.mxu0 0
      %361 = vmatpush.bf16.msra.mxu0 0
      %362 = vmatpush.bf16.msra.mxu0 %v329
      %363 = vmatmul.bf16.gmra.mxu0 %v332
      %v364 = vpop.f32.mrf.mxu0
      %v365 = vadd.f32 %v276, %v364
      %v366 = vpop.f32.mrf.mxu0
      %v367 = vadd.f32 %v278, %v366
      %368 = vmatmul.bf16.gmra.mxu0 %v335
      %v369 = vpop.f32.mrf.mxu0
      %v370 = vadd.f32 %v281, %v369
      %v371 = vpop.f32.mrf.mxu0
      %v372 = vadd.f32 %v283, %v371
      %373 = vmatmul.bf16.gmra.mxu0 %v338
      %v374 = vpop.f32.mrf.mxu0
      %v375 = vadd.f32 %v286, %v374
      %v376 = vpop.f32.mrf.mxu0
      %v377 = vadd.f32 %v288, %v376
      %378 = vmatmul.bf16.gmra.mxu0 %v341
      %v379 = vpop.f32.mrf.mxu0
      %v380 = vadd.f32 %v291, %v379
      %v381 = vpop.f32.mrf.mxu0
      %v382 = vadd.f32 %v293, %v381
      %383 = vmatmul.bf16.gmra.mxu0 %v344
      %v384 = vpop.f32.mrf.mxu0
      %v385 = vadd.f32 %v296, %v384
      %v386 = vpop.f32.mrf.mxu0
      %v387 = vadd.f32 %v298, %v386
      %388 = vmatmul.bf16.gmra.mxu0 %v347
      %v389 = vpop.f32.mrf.mxu0
      %v390 = vadd.f32 %v301, %v389
      %v391 = vpop.f32.mrf.mxu0
      %v392 = vadd.f32 %v303, %v391
      %393 = vmatmul.bf16.gmra.mxu0 %v350
      %v394 = vpop.f32.mrf.mxu0
      %v395 = vadd.f32 %v306, %v394
      %v396 = vpop.f32.mrf.mxu0
      %v397 = vadd.f32 %v308, %v396
      %398 = vmatmul.bf16.gmra.mxu0 %v353
      %v399 = vpop.f32.mrf.mxu0
      %v400 = vadd.f32 %v311, %v399
      %v401 = vpop.f32.mrf.mxu0
      %v402 = vadd.f32 %v313, %v401
      %403 = vdwg.mxu0
      %v404 = vld [vmem:[%s165 + $0x8] sm:$0xf]
      %v405 = vld [vmem:[%s165 + $0xc] sm:$0xf]
      %v406 = vld [vmem:[%s165 + $0x10] sm:$0xf]
      %v407 = vld [vmem:[%s165 + $0x14] sm:$0xf]
      %v408 = vld [vmem:[%s165 + $0x18] sm:$0xf]
      %v409 = vld [vmem:[%s165 + $0x1c] sm:$0xf]
      %v410 = vld [vmem:[%s165 + $0x20] sm:$0xf]
      %v411 = vld [vmem:[%s165 + $0x24] sm:$0xf]
      %v412 = vld [vmem:[%s165 + $0x28] sm:$0xf]
      %v413 = vld [vmem:[%s165 + $0x2c] sm:$0xf]
      %v414 = vld [vmem:[%s165 + $0x30] sm:$0xf]
      %v415 = vld [vmem:[%s165 + $0x34] sm:$0xf]
      %v416 = vld [vmem:[%s165 + $0x38] sm:$0xf]
      %v417 = vld [vmem:[%s165 + $0x3c] sm:$0xf]
      %v418 = vld [vmem:[%s165 + $0x40] sm:$0xf]
      %v419 = vld [vmem:[%s165 + $0x44] sm:$0xf]
      %s420 = scalar_lea.vmem %s1, 16
      %v421 = vld [vmem:[%s420] sm:$0xf]
      %v422 = vld [vmem:[%s420 + $0x4] sm:$0xf]
      %v439 = vunpack.c.l.b16 %v404
      %v440 = vunpack.c.l.b16 %v405
      %v441 = vunpack.c.l.b16 %v406
      %v442 = vunpack.c.l.b16 %v407
      %v443 = vunpack.c.l.b16 %v408
      %v444 = vunpack.c.l.b16 %v409
      %v445 = vunpack.c.l.b16 %v410
      %v446 = vunpack.c.l.b16 %v411
      %v447 = vunpack.c.l.b16 %v412
      %v448 = vunpack.c.l.b16 %v413
      %v449 = vunpack.c.l.b16 %v414
      %v450 = vunpack.c.l.b16 %v415
      %v451 = vunpack.c.l.b16 %v416
      %v452 = vunpack.c.l.b16 %v417
      %v453 = vunpack.c.l.b16 %v418
      %v454 = vunpack.c.l.b16 %v419
      %v455 = vpack.c.b16 %v440, %v439
      %v456 = vpack.c.b16 %v442, %v441
      %v457 = vpack.c.b16 %v444, %v443
      %v458 = vpack.c.b16 %v446, %v445
      %v459 = vpack.c.b16 %v448, %v447
      %v460 = vpack.c.b16 %v450, %v449
      %v461 = vpack.c.b16 %v452, %v451
      %v462 = vpack.c.b16 %v454, %v453
      %v465 = vunpack.c.l.b16 %v421
      %v466 = vunpack.c.l.b16 %v422
      %v467 = vpack.c.b16 %v466, %v465
      %v470 = vsel %vm241, %v455, 0
      %v473 = vsel %vm241, %v456, 0
      %v476 = vsel %vm241, %v457, 0
      %v479 = vsel %vm241, %v458, 0
      %v482 = vsel %vm241, %v459, 0
      %v485 = vsel %vm241, %v460, 0
      %v488 = vsel %vm241, %v461, 0
      %v491 = vsel %vm241, %v462, 0
      %493 = vmatpush.bf16.msra.mxu0 0
      %494 = vmatpush.bf16.msra.mxu0 0
      %495 = vmatpush.bf16.msra.mxu0 0
      %496 = vmatpush.bf16.msra.mxu0 0
      %497 = vmatpush.bf16.msra.mxu0 0
      %498 = vmatpush.bf16.msra.mxu0 0
      %499 = vmatpush.bf16.msra.mxu0 0
      %500 = vmatpush.bf16.msra.mxu0 %v467
      %501 = vmatmul.bf16.gmra.mxu0 %v470
      %v502 = vpop.f32.mrf.mxu0
      %v503 = vadd.f32 0.0, %v502
      %v504 = vpop.f32.mrf.mxu0
      %v505 = vadd.f32 0.0, %v504
      %506 = vmatmul.bf16.gmra.mxu0 %v473
      %v507 = vpop.f32.mrf.mxu0
      %v508 = vadd.f32 0.0, %v507
      %v509 = vpop.f32.mrf.mxu0
      %v510 = vadd.f32 0.0, %v509
      %511 = vmatmul.bf16.gmra.mxu0 %v476
      %v512 = vpop.f32.mrf.mxu0
      %v513 = vadd.f32 0.0, %v512
      %v514 = vpop.f32.mrf.mxu0
      %v515 = vadd.f32 0.0, %v514
      %516 = vmatmul.bf16.gmra.mxu0 %v479
      %v517 = vpop.f32.mrf.mxu0
      %v518 = vadd.f32 0.0, %v517
      %v519 = vpop.f32.mrf.mxu0
      %v520 = vadd.f32 0.0, %v519
      %521 = vmatmul.bf16.gmra.mxu0 %v482
      %v522 = vpop.f32.mrf.mxu0
      %v523 = vadd.f32 0.0, %v522
      %v524 = vpop.f32.mrf.mxu0
      %v525 = vadd.f32 0.0, %v524
      %526 = vmatmul.bf16.gmra.mxu0 %v485
      %v527 = vpop.f32.mrf.mxu0
      %v528 = vadd.f32 0.0, %v527
      %v529 = vpop.f32.mrf.mxu0
      %v530 = vadd.f32 0.0, %v529
      %531 = vmatmul.bf16.gmra.mxu0 %v488
      %v532 = vpop.f32.mrf.mxu0
      %v533 = vadd.f32 0.0, %v532
      %v534 = vpop.f32.mrf.mxu0
      %v535 = vadd.f32 0.0, %v534
      %536 = vmatmul.bf16.gmra.mxu0 %v491
      %v537 = vpop.f32.mrf.mxu0
      %v538 = vadd.f32 0.0, %v537
      %v539 = vpop.f32.mrf.mxu0
      %v540 = vadd.f32 0.0, %v539
      %541 = vdwg.mxu0
      %v542 = vadd.f32 %v365, %v503
      %v543 = vadd.f32 %v367, %v505
      %v544 = vadd.f32 %v370, %v508
      %v545 = vadd.f32 %v372, %v510
      %v546 = vadd.f32 %v375, %v513
      %v547 = vadd.f32 %v377, %v515
      %v548 = vadd.f32 %v380, %v518
      %v549 = vadd.f32 %v382, %v520
      %v550 = vadd.f32 %v385, %v523
      %v551 = vadd.f32 %v387, %v525
      %v552 = vadd.f32 %v390, %v528
      %v553 = vadd.f32 %v392, %v530
      %v554 = vadd.f32 %v395, %v533
      %v555 = vadd.f32 %v397, %v535
      %v556 = vadd.f32 %v400, %v538
      %v557 = vadd.f32 %v402, %v540
      %v558 = vld [vmem:[%s165 + $0xc] sm:$0xf]
      %v559 = vld [vmem:[%s165 + $0x10] sm:$0xf]
      %v560 = vld [vmem:[%s165 + $0x14] sm:$0xf]
      %v561 = vld [vmem:[%s165 + $0x18] sm:$0xf]
      %v562 = vld [vmem:[%s165 + $0x1c] sm:$0xf]
      %v563 = vld [vmem:[%s165 + $0x20] sm:$0xf]
      %v564 = vld [vmem:[%s165 + $0x24] sm:$0xf]
      %v565 = vld [vmem:[%s165 + $0x28] sm:$0xf]
      %v566 = vld [vmem:[%s165 + $0x2c] sm:$0xf]
      %v567 = vld [vmem:[%s165 + $0x30] sm:$0xf]
      %v568 = vld [vmem:[%s165 + $0x34] sm:$0xf]
      %v569 = vld [vmem:[%s165 + $0x38] sm:$0xf]
      %v570 = vld [vmem:[%s165 + $0x3c] sm:$0xf]
      %v571 = vld [vmem:[%s165 + $0x40] sm:$0xf]
      %v572 = vld [vmem:[%s165 + $0x44] sm:$0xf]
      %v573 = vld [vmem:[%s165 + $0x48] sm:$0xf]
      %s574 = scalar_lea.vmem %s1, 24
      %v575 = vld [vmem:[%s574] sm:$0xf]
      %v576 = vld [vmem:[%s574 + $0x4] sm:$0xf]
      %v593 = vunpack.c.l.b16 %v558
      %v594 = vunpack.c.l.b16 %v559
      %v595 = vunpack.c.l.b16 %v560
      %v596 = vunpack.c.l.b16 %v561
      %v597 = vunpack.c.l.b16 %v562
      %v598 = vunpack.c.l.b16 %v563
      %v599 = vunpack.c.l.b16 %v564
      %v600 = vunpack.c.l.b16 %v565
      %v601 = vunpack.c.l.b16 %v566
      %v602 = vunpack.c.l.b16 %v567
      %v603 = vunpack.c.l.b16 %v568
      %v604 = vunpack.c.l.b16 %v569
      %v605 = vunpack.c.l.b16 %v570
      %v606 = vunpack.c.l.b16 %v571
      %v607 = vunpack.c.l.b16 %v572
      %v608 = vunpack.c.l.b16 %v573
      %v609 = vpack.c.b16 %v594, %v593
      %v610 = vpack.c.b16 %v596, %v595
      %v611 = vpack.c.b16 %v598, %v597
      %v612 = vpack.c.b16 %v600, %v599
      %v613 = vpack.c.b16 %v602, %v601
      %v614 = vpack.c.b16 %v604, %v603
      %v615 = vpack.c.b16 %v606, %v605
      %v616 = vpack.c.b16 %v608, %v607
      %v619 = vunpack.c.l.b16 %v575
      %v620 = vunpack.c.l.b16 %v576
      %v621 = vpack.c.b16 %v620, %v619
      %v624 = vsel %vm241, %v609, 0
      %v627 = vsel %vm241, %v610, 0
      %v630 = vsel %vm241, %v611, 0
      %v633 = vsel %vm241, %v612, 0
      %v636 = vsel %vm241, %v613, 0
      %v639 = vsel %vm241, %v614, 0
      %v642 = vsel %vm241, %v615, 0
      %v645 = vsel %vm241, %v616, 0
      %647 = vmatpush.bf16.msra.mxu0 0
      %648 = vmatpush.bf16.msra.mxu0 0
      %649 = vmatpush.bf16.msra.mxu0 0
      %650 = vmatpush.bf16.msra.mxu0 0
      %651 = vmatpush.bf16.msra.mxu0 0
      %652 = vmatpush.bf16.msra.mxu0 0
      %653 = vmatpush.bf16.msra.mxu0 0
      %654 = vmatpush.bf16.msra.mxu0 %v621
      %655 = vmatmul.bf16.gmra.mxu0 %v624
      %v656 = vpop.f32.mrf.mxu0
      %v657 = vadd.f32 0.0, %v656
      %v658 = vpop.f32.mrf.mxu0
      %v659 = vadd.f32 0.0, %v658
      %660 = vmatmul.bf16.gmra.mxu0 %v627
      %v661 = vpop.f32.mrf.mxu0
      %v662 = vadd.f32 0.0, %v661
      %v663 = vpop.f32.mrf.mxu0
      %v664 = vadd.f32 0.0, %v663
      %665 = vmatmul.bf16.gmra.mxu0 %v630
      %v666 = vpop.f32.mrf.mxu0
      %v667 = vadd.f32 0.0, %v666
      %v668 = vpop.f32.mrf.mxu0
      %v669 = vadd.f32 0.0, %v668
      %670 = vmatmul.bf16.gmra.mxu0 %v633
      %v671 = vpop.f32.mrf.mxu0
      %v672 = vadd.f32 0.0, %v671
      %v673 = vpop.f32.mrf.mxu0
      %v674 = vadd.f32 0.0, %v673
      %675 = vmatmul.bf16.gmra.mxu0 %v636
      %v676 = vpop.f32.mrf.mxu0
      %v677 = vadd.f32 0.0, %v676
      %v678 = vpop.f32.mrf.mxu0
      %v679 = vadd.f32 0.0, %v678
      %680 = vmatmul.bf16.gmra.mxu0 %v639
      %v681 = vpop.f32.mrf.mxu0
      %v682 = vadd.f32 0.0, %v681
      %v683 = vpop.f32.mrf.mxu0
      %v684 = vadd.f32 0.0, %v683
      %685 = vmatmul.bf16.gmra.mxu0 %v642
      %v686 = vpop.f32.mrf.mxu0
      %v687 = vadd.f32 0.0, %v686
      %v688 = vpop.f32.mrf.mxu0
      %v689 = vadd.f32 0.0, %v688
      %690 = vmatmul.bf16.gmra.mxu0 %v645
      %v691 = vpop.f32.mrf.mxu0
      %v692 = vadd.f32 0.0, %v691
      %v693 = vpop.f32.mrf.mxu0
      %v694 = vadd.f32 0.0, %v693
      %695 = vdwg.mxu0
      %v696 = vadd.f32 %v542, %v657
      %v697 = vadd.f32 %v543, %v659
      %v698 = vadd.f32 %v544, %v662
      %v699 = vadd.f32 %v545, %v664
      %v700 = vadd.f32 %v546, %v667
      %v701 = vadd.f32 %v547, %v669
      %v702 = vadd.f32 %v548, %v672
      %v703 = vadd.f32 %v549, %v674
      %v704 = vadd.f32 %v550, %v677
      %v705 = vadd.f32 %v551, %v679
      %v706 = vadd.f32 %v552, %v682
      %v707 = vadd.f32 %v553, %v684
      %v708 = vadd.f32 %v554, %v687
      %v709 = vadd.f32 %v555, %v689
      %v710 = vadd.f32 %v556, %v692
      %v711 = vadd.f32 %v557, %v694
      %v712 = vld [vmem:[%s165 + $0x10] sm:$0xf]
      %v713 = vld [vmem:[%s165 + $0x14] sm:$0xf]
      %v714 = vld [vmem:[%s165 + $0x18] sm:$0xf]
      %v715 = vld [vmem:[%s165 + $0x1c] sm:$0xf]
      %v716 = vld [vmem:[%s165 + $0x20] sm:$0xf]
      %v717 = vld [vmem:[%s165 + $0x24] sm:$0xf]
      %v718 = vld [vmem:[%s165 + $0x28] sm:$0xf]
      %v719 = vld [vmem:[%s165 + $0x2c] sm:$0xf]
      %v720 = vld [vmem:[%s165 + $0x30] sm:$0xf]
      %v721 = vld [vmem:[%s165 + $0x34] sm:$0xf]
      %v722 = vld [vmem:[%s165 + $0x38] sm:$0xf]
      %v723 = vld [vmem:[%s165 + $0x3c] sm:$0xf]
      %v724 = vld [vmem:[%s165 + $0x40] sm:$0xf]
      %v725 = vld [vmem:[%s165 + $0x44] sm:$0xf]
      %v726 = vld [vmem:[%s165 + $0x48] sm:$0xf]
      %v727 = vld [vmem:[%s165 + $0x4c] sm:$0xf]
      %s728 = scalar_lea.vmem %s1, 32
      %v729 = vld [vmem:[%s728] sm:$0xf]
      %v730 = vld [vmem:[%s728 + $0x4] sm:$0xf]
      %v747 = vunpack.c.l.b16 %v712
      %v748 = vunpack.c.l.b16 %v713
      %v749 = vunpack.c.l.b16 %v714
      %v750 = vunpack.c.l.b16 %v715
      %v751 = vunpack.c.l.b16 %v716
      %v752 = vunpack.c.l.b16 %v717
      %v753 = vunpack.c.l.b16 %v718
      %v754 = vunpack.c.l.b16 %v719
      %v755 = vunpack.c.l.b16 %v720
      %v756 = vunpack.c.l.b16 %v721
      %v757 = vunpack.c.l.b16 %v722
      %v758 = vunpack.c.l.b16 %v723
      %v759 = vunpack.c.l.b16 %v724
      %v760 = vunpack.c.l.b16 %v725
      %v761 = vunpack.c.l.b16 %v726
      %v762 = vunpack.c.l.b16 %v727
      %v763 = vpack.c.b16 %v748, %v747
      %v764 = vpack.c.b16 %v750, %v749
      %v765 = vpack.c.b16 %v752, %v751
      %v766 = vpack.c.b16 %v754, %v753
      %v767 = vpack.c.b16 %v756, %v755
      %v768 = vpack.c.b16 %v758, %v757
      %v769 = vpack.c.b16 %v760, %v759
      %v770 = vpack.c.b16 %v762, %v761
      %v773 = vunpack.c.l.b16 %v729
      %v774 = vunpack.c.l.b16 %v730
      %v775 = vpack.c.b16 %v774, %v773
      %v778 = vsel %vm241, %v763, 0
      %v781 = vsel %vm241, %v764, 0
      %v784 = vsel %vm241, %v765, 0
      %v787 = vsel %vm241, %v766, 0
      %v790 = vsel %vm241, %v767, 0
      %v793 = vsel %vm241, %v768, 0
      %v796 = vsel %vm241, %v769, 0
      %v799 = vsel %vm241, %v770, 0
      %801 = vmatpush.bf16.msra.mxu0 0
      %802 = vmatpush.bf16.msra.mxu0 0
      %803 = vmatpush.bf16.msra.mxu0 0
      %804 = vmatpush.bf16.msra.mxu0 0
      %805 = vmatpush.bf16.msra.mxu0 0
      %806 = vmatpush.bf16.msra.mxu0 0
      %807 = vmatpush.bf16.msra.mxu0 0
      %808 = vmatpush.bf16.msra.mxu0 %v775
      %809 = vmatmul.bf16.gmra.mxu0 %v778
      %v810 = vpop.f32.mrf.mxu0
      %v811 = vadd.f32 0.0, %v810
      %v812 = vpop.f32.mrf.mxu0
      %v813 = vadd.f32 0.0, %v812
      %814 = vmatmul.bf16.gmra.mxu0 %v781
      %v815 = vpop.f32.mrf.mxu0
      %v816 = vadd.f32 0.0, %v815
      %v817 = vpop.f32.mrf.mxu0
      %v818 = vadd.f32 0.0, %v817
      %819 = vmatmul.bf16.gmra.mxu0 %v784
      %v820 = vpop.f32.mrf.mxu0
      %v821 = vadd.f32 0.0, %v820
      %v822 = vpop.f32.mrf.mxu0
      %v823 = vadd.f32 0.0, %v822
      %824 = vmatmul.bf16.gmra.mxu0 %v787
      %v825 = vpop.f32.mrf.mxu0
      %v826 = vadd.f32 0.0, %v825
      %v827 = vpop.f32.mrf.mxu0
      %v828 = vadd.f32 0.0, %v827
      %829 = vmatmul.bf16.gmra.mxu0 %v790
      %v830 = vpop.f32.mrf.mxu0
      %v831 = vadd.f32 0.0, %v830
      %v832 = vpop.f32.mrf.mxu0
      %v833 = vadd.f32 0.0, %v832
      %834 = vmatmul.bf16.gmra.mxu0 %v793
      %v835 = vpop.f32.mrf.mxu0
      %v836 = vadd.f32 0.0, %v835
      %v837 = vpop.f32.mrf.mxu0
      %v838 = vadd.f32 0.0, %v837
      %839 = vmatmul.bf16.gmra.mxu0 %v796
      %v840 = vpop.f32.mrf.mxu0
      %v841 = vadd.f32 0.0, %v840
      %v842 = vpop.f32.mrf.mxu0
      %v843 = vadd.f32 0.0, %v842
      %844 = vmatmul.bf16.gmra.mxu0 %v799
      %v845 = vpop.f32.mrf.mxu0
      %v846 = vadd.f32 0.0, %v845
      %v847 = vpop.f32.mrf.mxu0
      %v848 = vadd.f32 0.0, %v847
      %849 = vdwg.mxu0
      %v850 = vadd.f32 %v696, %v811
      %v851 = vadd.f32 %v697, %v813
      %v852 = vadd.f32 %v698, %v816
      %v853 = vadd.f32 %v699, %v818
      %v854 = vadd.f32 %v700, %v821
      %v855 = vadd.f32 %v701, %v823
      %v856 = vadd.f32 %v702, %v826
      %v857 = vadd.f32 %v703, %v828
      %v858 = vadd.f32 %v704, %v831
      %v859 = vadd.f32 %v705, %v833
      %v860 = vadd.f32 %v706, %v836
      %v861 = vadd.f32 %v707, %v838
      %v862 = vadd.f32 %v708, %v841
      %v863 = vadd.f32 %v709, %v843
      %v864 = vadd.f32 %v710, %v846
      %v865 = vadd.f32 %v711, %v848
      %v867 = vperm.slane %v172, 0
      %v869 = vadd.f32 %v850, %v867
      %v870 = vadd.f32 %v851, %v867
      %v871 = vadd.f32 %v852, %v867
      %v872 = vadd.f32 %v853, %v867
      %v873 = vadd.f32 %v854, %v867
      %v874 = vadd.f32 %v855, %v867
      %v875 = vadd.f32 %v856, %v867
      %v876 = vadd.f32 %v857, %v867
      %v877 = vadd.f32 %v858, %v867
      %v878 = vadd.f32 %v859, %v867
      %v879 = vadd.f32 %v860, %v867
      %v880 = vadd.f32 %v861, %v867
      %v881 = vadd.f32 %v862, %v867
      %v882 = vadd.f32 %v863, %v867
      %v883 = vadd.f32 %v864, %v867
      %v884 = vadd.f32 %v865, %v867
      %v885 = vpack.c.bf16 %v869, %v869
      %v886 = vpack.c.bf16 %v870, %v870
      %v887 = vpack.c.bf16 %v871, %v871
      %v888 = vpack.c.bf16 %v872, %v872
      %v889 = vpack.c.bf16 %v873, %v873
      %v890 = vpack.c.bf16 %v874, %v874
      %v891 = vpack.c.bf16 %v875, %v875
      %v892 = vpack.c.bf16 %v876, %v876
      %v893 = vpack.c.bf16 %v877, %v877
      %v894 = vpack.c.bf16 %v878, %v878
      %v895 = vpack.c.bf16 %v879, %v879
      %v896 = vpack.c.bf16 %v880, %v880
      %v897 = vpack.c.bf16 %v881, %v881
      %v898 = vpack.c.bf16 %v882, %v882
      %v899 = vpack.c.bf16 %v883, %v883
      %v900 = vpack.c.bf16 %v884, %v884
      %vm901 = vcmask 257024
      %902 = vst.msk [vmem:[%s170] sm:$0xf] %vm901, %v885
      %903 = vst.msk [vmem:[%s170 + $0x4] sm:$0xf] %vm901, %v886
      %904 = vst.msk [vmem:[%s170 + $0x8] sm:$0xf] %vm901, %v887
      %905 = vst.msk [vmem:[%s170 + $0xc] sm:$0xf] %vm901, %v888
      %906 = vst.msk [vmem:[%s170 + $0x10] sm:$0xf] %vm901, %v889
      %907 = vst.msk [vmem:[%s170 + $0x14] sm:$0xf] %vm901, %v890
      %908 = vst.msk [vmem:[%s170 + $0x18] sm:$0xf] %vm901, %v891
      %909 = vst.msk [vmem:[%s170 + $0x1c] sm:$0xf] %vm901, %v892
      %910 = vst.msk [vmem:[%s170 + $0x20] sm:$0xf] %vm901, %v893
      %911 = vst.msk [vmem:[%s170 + $0x24] sm:$0xf] %vm901, %v894
      %912 = vst.msk [vmem:[%s170 + $0x28] sm:$0xf] %vm901, %v895
      %913 = vst.msk [vmem:[%s170 + $0x2c] sm:$0xf] %vm901, %v896
      %914 = vst.msk [vmem:[%s170 + $0x30] sm:$0xf] %vm901, %v897
      %915 = vst.msk [vmem:[%s170 + $0x34] sm:$0xf] %vm901, %v898
      %916 = vst.msk [vmem:[%s170 + $0x38] sm:$0xf] %vm901, %v899
      %917 = vst.msk [vmem:[%s170 + $0x3c] sm:$0xf] %vm901, %v900
      %p918 = scmp.lt.s32.totalorder %s14, 1
      %s919 = scalar_select %p918, %s14, 1
      %s920 = smul.addr %s919, 16
      %s921 = smul.addr %s920, 4
      %s922 = scalar_lea.vmem %s3, %s921
      // Predicated region
      $region33: #{temporal_conv_forward.1} parent=31 // pred_check
        %p923 = pneg %p100
      $region34: #{temporal_conv_forward.1} parent=31 // pred_check_branch
        %925 = sbr.rel (%p923) target = $region36
      $region35: #{temporal_conv_forward.1} parent=31 // pred_region
        _
      $region36: #{temporal_conv_forward.1} parent=31 // pred_fallthru
        _
    $region32: #{temporal_conv_forward.1} parent=5 // pred_fallthru
      _
    %p926 = scmp.le.s32.totalorder 2, %s9
    // Predicated region
    $region37: #{temporal_conv_forward.1} parent=5 // pred_check
      %p927 = pneg %p926
    $region38: #{temporal_conv_forward.1} parent=5 // pred_check_branch
      %929 = sbr.rel (%p927) target = $region40
    $region39: #{temporal_conv_forward.1} parent=5 // pred_region
      %s930 = ssub.s32 %s9, 2
      // Predicated region
      $region41: #{temporal_conv_forward.1} parent=39 // pred_check
        %p931 = pneg %p106
      $region42: #{temporal_conv_forward.1} parent=39 // pred_check_branch
        %933 = sbr.rel (%p931) target = $region44
      $region43: #{temporal_conv_forward.1} parent=39 // pred_region
        %p934 = scmp.lt.s32.totalorder %s15, 1
        %s935 = scalar_select %p934, %s15, 1
        %s936 = smul.addr %s935, 16
        %s937 = smul.addr %s936, 4
        %s938 = scalar_lea.vmem %s3, %s937
      $region44: #{temporal_conv_forward.1} parent=39 // pred_fallthru
        _
    $region40: #{temporal_conv_forward.1} parent=5 // pred_fallthru
      _
  $region6: #{temporal_conv_forward.1} parent=0 // loop_footer
    %s13 = sadd.s32 1, %s9
  $region7: #{temporal_conv_forward.1} parent=0 // loop_footer_branch
    %8 = sbr.rel target = $region3
  $region8: #{temporal_conv_forward.1} parent=0 // loop_exit
    _

</llo_original>
